<compile_context>
chip_gen: v6e
topology: v6e:2x2x1
jax: 0.10.0
libtpu: 0.0.40
codegen_flags: <defaults>
</compile_context>

<pallas_src>
import jax
import jax.numpy as jnp
from jax.experimental import pallas as pl
from jax.experimental.pallas import tpu as pltpu

IN_F, HID, OUT_F = 13, 32, 1
TB_MAX = 16384         # batch-tile cap (lanes); ~9 MiB total VMEM at this size
BN_EPS = 1e-5


def _mlp_kernel(x_ref, w1_ref, b1_ref, w2_ref, b2_ref, w3_ref, b3_ref, o_ref):
    # x_ref: (13, tb)  w1: (32, 13)  w2': (32, 32)  w3': (1, 32)  (PyTorch (out, in))
    # Batch-in-lanes: every intermediate is (features, tb) -> lane-dense VPU work
    # and a lane-dense (1, tb) output store. All ops are column-independent, so
    # garbage lanes in a clamped edge block never contaminate valid outputs.
    h = jnp.dot(w1_ref[...], x_ref[...],
                preferred_element_type=jnp.float32)                    # (32, tb)
    h = jnp.maximum(h + b1_ref[...], 0.0)                               # ReLU
    # bn1 is folded into (w2', b2'); bn2 into (w3', b3'); dropout = identity (eval).
    h = jnp.dot(w2_ref[...], h, preferred_element_type=jnp.float32)     # (32, tb)
    h = jnp.maximum(h + b2_ref[...], 0.0)                               # ReLU
    o_ref[...] = (jnp.dot(w3_ref[...], h, preferred_element_type=jnp.float32)
                  + b3_ref[...])                                         # (1, tb)


def _fold_bn_into_linear(w, b, gamma, beta, mean, var):
    """Fold eval-mode BatchNorm1d(1) (scalar affine y = s*x + t) into the
    *following* Linear layer (PyTorch (out, in) weight layout):
        W @ (s*h + t) + b  ==  (s*W) @ h + (b + t * W.sum(axis=in))
    """
    scale = gamma / jnp.sqrt(var + BN_EPS)      # (1,)
    shift = beta - mean * scale                 # (1,)
    w_f = w * scale
    b_f = b + shift * jnp.sum(w, axis=1)
    return w_f.astype(jnp.float32), b_f.astype(jnp.float32)


def _choose_tb(n):
    """Pick the batch tile (static, from the array shape)."""
    if n <= 256:
        return n                         # single exact-fit block (no alignment req.)
    tb = min(TB_MAX, pl.cdiv(n, 2))      # >= 2 grid steps -> both v7x TensorCores busy
    tb = pl.cdiv(tb, 128) * 128          # lane-aligned (last block dim % 128 == 0)
    return min(tb, TB_MAX)


@jax.jit
def binary_classifier_forward(x_ncl, params):
    (w1, b1, w2, b2, w3, b3,
     bn1_g, bn1_b, bn1_m, bn1_v,
     bn2_g, bn2_b, bn2_m, bn2_v) = params

    n = x_ncl.shape[0]
    # Squeeze C=1 and transpose ONCE to the lane-dense (IN_F, N) layout the
    # kernel wants (one extra HBM pass over x, removes per-step XLU transposes
    # and the 13->128 lane padding of the old (tb, 13) block).
    x_t = x_ncl.reshape(n, IN_F).astype(jnp.float32).T        # (13, n)

    # Fold the two eval-mode BatchNorms into the following linears (trace time).
    w2f, b2f = _fold_bn_into_linear(w2, b2, bn1_g, bn1_b, bn1_m, bn1_v)
    w3f, b3f = _fold_bn_into_linear(w3, b3, bn2_g, bn2_b, bn2_m, bn2_v)

    tb = _choose_tb(n)
    grid = (pl.cdiv(n, tb),)

    # Advisory cost hint: this kernel is memory/step-overhead bound, not MXU bound.
    flops = 2 * n * (IN_F * HID + HID * HID + HID * OUT_F)
    bytes_accessed = 4 * (n * IN_F + n * OUT_F
                          + w1.size + w2.size + w3.size + 2 * HID + OUT_F)
    cost = pl.CostEstimate(flops=flops, transcendentals=0,
                           bytes_accessed=bytes_accessed)

    out = pl.pallas_call(
        _mlp_kernel,
        out_shape=jax.ShapeDtypeStruct((1, n), jnp.float32),
        grid_spec=pltpu.PrefetchScalarGridSpec(
            num_scalar_prefetch=0,
            grid=grid,
            in_specs=[
                pl.BlockSpec((IN_F, tb), lambda i: (0, i)),     # x tile (lane-dense)
                pl.BlockSpec((HID, IN_F), lambda i: (0, 0)),    # W1 (out, in)
                pl.BlockSpec((HID, 1), lambda i: (0, 0)),       # b1
                pl.BlockSpec((HID, HID), lambda i: (0, 0)),     # W2' (BN1 folded)
                pl.BlockSpec((HID, 1), lambda i: (0, 0)),       # b2'
                pl.BlockSpec((OUT_F, HID), lambda i: (0, 0)),   # W3' (BN2 folded)
                pl.BlockSpec((OUT_F, 1), lambda i: (0, 0)),     # b3'
            ],
            out_specs=pl.BlockSpec((1, tb), lambda i: (0, i)),  # lane-dense output
        ),
        compiler_params=pltpu.CompilerParams(
            dimension_semantics=("parallel",),
            vmem_limit_bytes=32 * 1024 * 1024),   # <= physical on v5e/v6e/v7x
        cost_estimate=cost,
    )(x_t, w1, b1.reshape(HID, 1), w2f, b2f.reshape(HID, 1),
      w3f, b3f.reshape(OUT_F, 1))

    return out.reshape(n, 1, OUT_F)


def init_params(key):
    """Deterministic init mirroring PyTorch shapes ((out, in) Linear layout).

    BatchNorm running stats get non-trivial values so the BN path is exercised.
    """
    ks = jax.random.split(key, 8)

    def linear(kw, kb, fan_in, fan_out):
        bound = 1.0 / jnp.sqrt(float(fan_in))
        w = jax.random.uniform(kw, (fan_out, fan_in), jnp.float32, -bound, bound)
        b = jax.random.uniform(kb, (fan_out,), jnp.float32, -bound, bound)
        return w, b

    w1, b1 = linear(ks[0], ks[1], IN_F, HID)
    w2, b2 = linear(ks[2], ks[3], HID, HID)
    w3, b3 = linear(ks[4], ks[5], HID, OUT_F)

    bn1_g = jnp.array([1.1], jnp.float32)
    bn1_b = jnp.array([-0.05], jnp.float32)
    bn1_m = jax.random.normal(ks[6], (1,), jnp.float32) * 0.1
    bn1_v = jnp.array([0.9], jnp.float32)

    bn2_g = jnp.array([0.95], jnp.float32)
    bn2_b = jnp.array([0.02], jnp.float32)
    bn2_m = jax.random.normal(ks[7], (1,), jnp.float32) * 0.1
    bn2_v = jnp.array([1.2], jnp.float32)

    return (w1, b1, w2, b2, w3, b3,
            bn1_g, bn1_b, bn1_m, bn1_v,
            bn2_g, bn2_b, bn2_m, bn2_v)


def reference_forward(x_ncl, params):
    """Pure-JAX reference replicating the PyTorch eval-mode forward."""
    (w1, b1, w2, b2, w3, b3,
     bn1_g, bn1_b, bn1_m, bn1_v,
     bn2_g, bn2_b, bn2_m, bn2_v) = params
    x = x_ncl.astype(jnp.float32)                          # (N, 1, 13)
    h = jax.nn.relu(jnp.einsum('ncl,hl->nch', x, w1) + b1)
    h = (h - bn1_m[:, None]) / jnp.sqrt(bn1_v[:, None] + BN_EPS) * bn1_g[:, None] + bn1_b[:, None]
    h = jax.nn.relu(jnp.einsum('nch,kh->nck', h, w2) + b2)
    h = (h - bn2_m[:, None]) / jnp.sqrt(bn2_v[:, None] + BN_EPS) * bn2_g[:, None] + bn2_b[:, None]
    # dropout: identity in eval mode
    return jnp.einsum('nck,ok->nco', h, w3) + b3


if __name__ == "__main__":
    key = jax.random.PRNGKey(0)
    k_params, k_x1, k_x2 = jax.random.split(key, 3)

    params = init_params(k_params)

    # Small batch (not a multiple of 8): single exact-fit block, grid = 1.
    x_small = jax.random.normal(k_x1, (6, 1, IN_F), jnp.float32)   # (N, C=1, L=13)
    out_small = jax.block_until_ready(binary_classifier_forward(x_small, params))
    ref_small = reference_forward(x_small, params)
    assert out_small.shape == (6, 1, 1), out_small.shape
    assert jnp.allclose(out_small, ref_small, rtol=1e-5, atol=1e-5), (
        f"max abs err {jnp.max(jnp.abs(out_small - ref_small))}")

    # Larger batch: >= 2 parallel grid steps (v7x megacore) + partial, clamped
    # tail block (2000 rows -> tb=1024, grid=2).
    x_big = jax.random.normal(k_x2, (2000, 1, IN_F), jnp.float32)
    out_big = jax.block_until_ready(binary_classifier_forward(x_big, params))
    ref_big = reference_forward(x_big, params)
    assert out_big.shape == (2000, 1, 1), out_big.shape
    assert jnp.allclose(out_big, ref_big, rtol=1e-5, atol=1e-5), (
        f"max abs err {jnp.max(jnp.abs(out_big - ref_big))}")

    print("KERNEL_OK")
</pallas_src>

<mosaic_0001>
module attributes {stable_mosaic.version = 11 : i64} {
  func.func @_mlp_kernel(%arg0: i32, %arg1: memref<13x6xf32, #tpu.memory_space<vmem>>, %arg2: memref<32x13xf32, #tpu.memory_space<vmem>>, %arg3: memref<32x1xf32, #tpu.memory_space<vmem>>, %arg4: memref<32x32xf32, #tpu.memory_space<vmem>>, %arg5: memref<32x1xf32, #tpu.memory_space<vmem>>, %arg6: memref<1x32xf32, #tpu.memory_space<vmem>>, %arg7: memref<1x1xf32, #tpu.memory_space<vmem>>, %arg8: memref<1x6xf32, #tpu.memory_space<vmem>>) attributes {dimension_semantics = [#tpu.dimension_semantics<parallel>], iteration_bounds = array<i64: 1>, scalar_prefetch = 0 : i64, scratch_operands = 0 : i64, tpu.core_type = #tpu.core_type<tc>, window_params = [{transform_indices = @transform_0, window_bounds = array<i64: 13, 6>}, {pipeline_mode = #tpu.pipeline_mode<synchronous>, transform_indices = @transform_1, window_bounds = array<i64: 32, 13>}, {pipeline_mode = #tpu.pipeline_mode<synchronous>, transform_indices = @transform_2, window_bounds = array<i64: 32, 1>}, {pipeline_mode = #tpu.pipeline_mode<synchronous>, transform_indices = @transform_3, window_bounds = array<i64: 32, 32>}, {pipeline_mode = #tpu.pipeline_mode<synchronous>, transform_indices = @transform_4, window_bounds = array<i64: 32, 1>}, {pipeline_mode = #tpu.pipeline_mode<synchronous>, transform_indices = @transform_5, window_bounds = array<i64: 1, 32>}, {pipeline_mode = #tpu.pipeline_mode<synchronous>, transform_indices = @transform_6, window_bounds = array<i64: 1, 1>}, {transform_indices = @transform_7, window_bounds = array<i64: 1, 6>}]} {
    %c0 = arith.constant 0 : index
    %c0_0 = arith.constant 0 : index
    %0 = vector.load %arg2[%c0, %c0_0] : memref<32x13xf32, #tpu.memory_space<vmem>>, vector<32x13xf32>
    %c0_1 = arith.constant 0 : index
    %c0_2 = arith.constant 0 : index
    %1 = vector.load %arg1[%c0_1, %c0_2] : memref<13x6xf32, #tpu.memory_space<vmem>>, vector<13x6xf32>
    %cst = arith.constant dense<0.000000e+00> : vector<32x6xf32>
    %2 = tpu.matmul %0, %1, %cst {dimension_numbers = #tpu.dot_dimension_numbers<[1], [0], [0], [1], [0, 0, 1, 1], [], []>} : vector<32x13xf32>, vector<13x6xf32>, vector<32x6xf32> -> vector<32x6xf32>
    %c0_3 = arith.constant 0 : index
    %c0_4 = arith.constant 0 : index
    %3 = vector.load %arg3[%c0_3, %c0_4] : memref<32x1xf32, #tpu.memory_space<vmem>>, vector<32x1xf32>
    %4 = vector.broadcast %3 : vector<32x1xf32> to vector<32x6xf32>
    %5 = arith.addf %2, %4 : vector<32x6xf32>
    %cst_5 = arith.constant 0.000000e+00 : f32
    %6 = vector.broadcast %cst_5 : f32 to vector<32x6xf32>
    %7 = arith.maximumf %5, %6 : vector<32x6xf32>
    %c0_6 = arith.constant 0 : index
    %c0_7 = arith.constant 0 : index
    %8 = vector.load %arg4[%c0_6, %c0_7] : memref<32x32xf32, #tpu.memory_space<vmem>>, vector<32x32xf32>
    %cst_8 = arith.constant dense<0.000000e+00> : vector<32x6xf32>
    %9 = tpu.matmul %8, %7, %cst_8 {dimension_numbers = #tpu.dot_dimension_numbers<[1], [0], [0], [1], [0, 0, 1, 1], [], []>} : vector<32x32xf32>, vector<32x6xf32>, vector<32x6xf32> -> vector<32x6xf32>
    %c0_9 = arith.constant 0 : index
    %c0_10 = arith.constant 0 : index
    %10 = vector.load %arg5[%c0_9, %c0_10] : memref<32x1xf32, #tpu.memory_space<vmem>>, vector<32x1xf32>
    %11 = vector.broadcast %10 : vector<32x1xf32> to vector<32x6xf32>
    %12 = arith.addf %9, %11 : vector<32x6xf32>
    %cst_11 = arith.constant 0.000000e+00 : f32
    %13 = vector.broadcast %cst_11 : f32 to vector<32x6xf32>
    %14 = arith.maximumf %12, %13 : vector<32x6xf32>
    %c0_12 = arith.constant 0 : index
    %c0_13 = arith.constant 0 : index
    %15 = vector.load %arg6[%c0_12, %c0_13] : memref<1x32xf32, #tpu.memory_space<vmem>>, vector<1x32xf32>
    %cst_14 = arith.constant dense<0.000000e+00> : vector<1x6xf32>
    %16 = tpu.matmul %15, %14, %cst_14 {dimension_numbers = #tpu.dot_dimension_numbers<[1], [0], [0], [1], [0, 0, 1, 1], [], []>} : vector<1x32xf32>, vector<32x6xf32>, vector<1x6xf32> -> vector<1x6xf32>
    %c0_15 = arith.constant 0 : index
    %c0_16 = arith.constant 0 : index
    %17 = vector.load %arg7[%c0_15, %c0_16] : memref<1x1xf32, #tpu.memory_space<vmem>>, vector<1x1xf32>
    %18 = vector.broadcast %17 : vector<1x1xf32> to vector<1x6xf32>
    %19 = arith.addf %16, %18 : vector<1x6xf32>
    %c0_17 = arith.constant 0 : index
    %c0_18 = arith.constant 0 : index
    %20 = vector.load %arg8[%c0_17, %c0_18] : memref<1x6xf32, #tpu.memory_space<vmem>>, vector<1x6xf32>
    tpu.vector_store %arg8[%c0_17, %c0_18], %19 {strides = array<i32>} : memref<1x6xf32, #tpu.memory_space<vmem>>, vector<1x6xf32>,
    return
  }
  func.func @transform_0(%arg0: i32) -> (i32, i32) {
    %c0_i32 = arith.constant 0 : i32
    %c0_i32_0 = arith.constant 0 : i32
    return %c0_i32, %arg0 : i32, i32
  }
  func.func @transform_1(%arg0: i32) -> (i32, i32) {
    %c0_i32 = arith.constant 0 : i32
    %c0_i32_0 = arith.constant 0 : i32
    %c0_i32_1 = arith.constant 0 : i32
    return %c0_i32, %c0_i32_0 : i32, i32
  }
  func.func @transform_2(%arg0: i32) -> (i32, i32) {
    %c0_i32 = arith.constant 0 : i32
    %c0_i32_0 = arith.constant 0 : i32
    %c0_i32_1 = arith.constant 0 : i32
    return %c0_i32, %c0_i32_0 : i32, i32
  }
  func.func @transform_3(%arg0: i32) -> (i32, i32) {
    %c0_i32 = arith.constant 0 : i32
    %c0_i32_0 = arith.constant 0 : i32
    %c0_i32_1 = arith.constant 0 : i32
    return %c0_i32, %c0_i32_0 : i32, i32
  }
  func.func @transform_4(%arg0: i32) -> (i32, i32) {
    %c0_i32 = arith.constant 0 : i32
    %c0_i32_0 = arith.constant 0 : i32
    %c0_i32_1 = arith.constant 0 : i32
    return %c0_i32, %c0_i32_0 : i32, i32
  }
  func.func @transform_5(%arg0: i32) -> (i32, i32) {
    %c0_i32 = arith.constant 0 : i32
    %c0_i32_0 = arith.constant 0 : i32
    %c0_i32_1 = arith.constant 0 : i32
    return %c0_i32, %c0_i32_0 : i32, i32
  }
  func.func @transform_6(%arg0: i32) -> (i32, i32) {
    %c0_i32 = arith.constant 0 : i32
    %c0_i32_0 = arith.constant 0 : i32
    %c0_i32_1 = arith.constant 0 : i32
    return %c0_i32, %c0_i32_0 : i32, i32
  }
  func.func @transform_7(%arg0: i32) -> (i32, i32) {
    %c0_i32 = arith.constant 0 : i32
    %c0_i32_0 = arith.constant 0 : i32
    return %c0_i32, %arg0 : i32, i32
  }
}

</mosaic_0001>

<llo_original>
// kernel: binary_classifier_forward.1
$region0: #{binary_classifier_forward.1}
  #allocation0 [shape = 'u32[]', space=smem, size = 0x4, offset = 0x4, fixed_abs, tag = 'smem constant byte address 0x4 - core index']
  #allocation1 [shape = 'u32[144,128]{1,0:T(1,128)}', space=vmem, size = 0x12000, scoped, tag = 'internal scratch']
  #allocation2 [shape = 'f32[1,1]{1,0:T(1,128)S(1)}', space=vmem, size = 0x200, scoped, tag = 'scoped memory for binary_classifier_forward.1']
  %s0 = inlined_call_operand.vmem [shape: f32[13,6], index: 0, kind: input, shape index: {}]
  %s1 = inlined_call_operand.vmem [shape: f32[32,13], index: 1, kind: input, shape index: {}]
  %s2 = inlined_call_operand.vmem [shape: f32[32,1], index: 2, kind: input, shape index: {}]
  %s3 = inlined_call_operand.vmem [shape: f32[32,32], index: 3, kind: input, shape index: {}]
  %s4 = inlined_call_operand.vmem [shape: f32[32,1], index: 4, kind: input, shape index: {}]
  %s5 = inlined_call_operand.vmem [shape: f32[1,32], index: 5, kind: input, shape index: {}]
  %s6 = inlined_call_operand.<no memory space> [shape: f32[1,1], index: 6, kind: input, shape index: {}]
  %s7 = inlined_call_operand.hbm [shape: f32[1,6], index: 7, kind: output, shape index: {}]
  %s8 = sld [smem:[#allocation0]]
  $region38: #{binary_classifier_forward.1} parent=0
    _
  %s10 = ssub.s32 1, %s8
  %s11 = scalar_select 0, %s10, %s8
  %v12 = vstv %s6
  %13 = vst [vmem:[#allocation2] sm:$0x1] %v12
  $region1: #{binary_classifier_forward.1} parent=0
    #allocation3 [shape = 'u8[512]{0}', space=vmem, size = 0x400, scoped, tag = 'output window, operand 0, single buffered']
    #allocation4 [shape = 's32[1]{0}', space=sflag, size = 0x4, scoped, tag = 'scoped memory for binary_classifier_forward.1']
    %14 = vsyncpa [#allocation4], 0
    // Predicated region
    $region2: #{binary_classifier_forward.1} parent=1 // pred_check
      _
    $region3: #{binary_classifier_forward.1} parent=1 // pred_check_branch
      %16 = sbr.rel (0) target = $region5
    $region4: #{binary_classifier_forward.1} parent=1 // pred_region
      _
    $region5: #{binary_classifier_forward.1} parent=1 // pred_fallthru
      _
    // Predicated region
    $region6: #{binary_classifier_forward.1} parent=1 // pred_check
      _
    $region7: #{binary_classifier_forward.1} parent=1 // pred_check_branch
      %18 = sbr.rel (0) target = $region9
    $region8: #{binary_classifier_forward.1} parent=1 // pred_region
      _
    $region9: #{binary_classifier_forward.1} parent=1 // pred_fallthru
      _
    // Predicated region
    $region10: #{binary_classifier_forward.1} parent=1 // pred_check
      _
    $region11: #{binary_classifier_forward.1} parent=1 // pred_check_branch
      %20 = sbr.rel (0) target = $region13
    $region12: #{binary_classifier_forward.1} parent=1 // pred_region
      _
    $region13: #{binary_classifier_forward.1} parent=1 // pred_fallthru
      _
    // Predicated region
    $region14: #{binary_classifier_forward.1} parent=1 // pred_check
      _
    $region15: #{binary_classifier_forward.1} parent=1 // pred_check_branch
      %22 = sbr.rel (0) target = $region17
    $region16: #{binary_classifier_forward.1} parent=1 // pred_region
      _
    $region17: #{binary_classifier_forward.1} parent=1 // pred_fallthru
      _
    // Predicated region
    $region18: #{binary_classifier_forward.1} parent=1 // pred_check
      _
    $region19: #{binary_classifier_forward.1} parent=1 // pred_check_branch
      %24 = sbr.rel (0) target = $region21
    $region20: #{binary_classifier_forward.1} parent=1 // pred_region
      _
    $region21: #{binary_classifier_forward.1} parent=1 // pred_fallthru
      _
    // Predicated region
    $region22: #{binary_classifier_forward.1} parent=1 // pred_check
      _
    $region23: #{binary_classifier_forward.1} parent=1 // pred_check_branch
      %26 = sbr.rel (0) target = $region25
    $region24: #{binary_classifier_forward.1} parent=1 // pred_region
      _
    $region25: #{binary_classifier_forward.1} parent=1 // pred_fallthru
      _
    // Predicated region
    $region26: #{binary_classifier_forward.1} parent=1 // pred_check
      _
    $region27: #{binary_classifier_forward.1} parent=1 // pred_check_branch
      %28 = sbr.rel (0) target = $region29
    $region28: #{binary_classifier_forward.1} parent=1 // pred_region
      _
    $region29: #{binary_classifier_forward.1} parent=1 // pred_fallthru
      _
    %v29 = vld [vmem:[%s1] sm:$0xff]
    %v30 = vld [vmem:[%s1 + $0x8] sm:$0xff]
    %v31 = vld [vmem:[%s1 + $0x10] sm:$0xff]
    %v32 = vld [vmem:[%s1 + $0x18] sm:$0xff]
    %v33 = vld [vmem:[%s0] sm:$0xff]
    %v34 = vld [vmem:[%s0 + $0x8] sm:$0x1f]
    %v35 = vld [vmem:[%s2] sm:$0xff]
    %v36 = vld [vmem:[%s2 + $0x8] sm:$0xff]
    %v37 = vld [vmem:[%s2 + $0x10] sm:$0xff]
    %v38 = vld [vmem:[%s2 + $0x18] sm:$0xff]
    %40 = vset.pattern.permute.xlu0 0
    %41 = vperm.xlu0 %40, %v35
    %v42 = vpop.permute.xlu0 %41
    %45 = vset.pattern.permute.xlu0 0
    %46 = vperm.xlu0 %45, %v36
    %v47 = vpop.permute.xlu0 %46
    %50 = vset.pattern.permute.xlu0 0
    %51 = vperm.xlu0 %50, %v37
    %v52 = vpop.permute.xlu0 %51
    %55 = vset.pattern.permute.xlu0 0
    %56 = vperm.xlu0 %55, %v38
    %v57 = vpop.permute.xlu0 %56
    %vm59 = vcmask 105472
    %v61 = vsel %vm59, %v29, 0
    %v64 = vsel %vm59, %v30, 0
    %v67 = vsel %vm59, %v31, 0
    %v70 = vsel %vm59, %v32, 0
    %vm72 = vcmask 1044480
    %v74 = vsel %vm72, %v34, 0
    %76 = vmatprep.subr.mxu0 0.0
    %77 = vmatpush1.msra.mxu0 0.0
    %78 = vmatprep.subr.mxu0 0.0
    %79 = vmatpush1.msra.mxu0 0.0
    %80 = vmatprep.subr.mxu0 0.0
    %81 = vmatpush1.msra.mxu0 0.0
    %82 = vmatprep.subr.mxu0 0.0
    %83 = vmatpush1.msra.mxu0 0.0
    %84 = vmatprep.subr.mxu0 0.0
    %85 = vmatpush1.msra.mxu0 0.0
    %86 = vmatprep.subr.mxu0 0.0
    %87 = vmatpush1.msra.mxu0 0.0
    %88 = vmatprep.subr.mxu0 0.0
    %89 = vmatpush1.msra.mxu0 0.0
    %90 = vmatprep.subr.mxu0 0.0
    %91 = vmatpush1.msra.mxu0 0.0
    %92 = vmatprep.subr.mxu0 0.0
    %93 = vmatpush1.msra.mxu0 0.0
    %94 = vmatprep.subr.mxu0 0.0
    %95 = vmatpush1.msra.mxu0 0.0
    %96 = vmatprep.subr.mxu0 0.0
    %97 = vmatpush1.msra.mxu0 0.0
    %98 = vmatprep.subr.mxu0 0.0
    %99 = vmatpush1.msra.mxu0 0.0
    %100 = vmatprep.subr.mxu0 0.0
    %101 = vmatpush1.msra.mxu0 0.0
    %102 = vmatprep.subr.mxu0 0.0
    %103 = vmatpush1.msra.mxu0 0.0
    %104 = vmatprep.subr.mxu0 0.0
    %105 = vmatpush1.msra.mxu0 %v74
    %106 = vmatprep.subr.mxu0 0.0
    %107 = vmatpush1.msra.mxu0 %v33
    %108 = vmatprep.subr.mxu0 0.0
    %109 = vmatpush2.msra.mxu0 0.0
    %110 = vmatprep.subr.mxu0 0.0
    %111 = vmatpush2.msra.mxu0 0.0
    %112 = vmatprep.subr.mxu0 0.0
    %113 = vmatpush2.msra.mxu0 0.0
    %114 = vmatprep.subr.mxu0 0.0
    %115 = vmatpush2.msra.mxu0 0.0
    %116 = vmatprep.subr.mxu0 0.0
    %117 = vmatpush2.msra.mxu0 0.0
    %118 = vmatprep.subr.mxu0 0.0
    %119 = vmatpush2.msra.mxu0 0.0
    %120 = vmatprep.subr.mxu0 0.0
    %121 = vmatpush2.msra.mxu0 0.0
    %122 = vmatprep.subr.mxu0 0.0
    %123 = vmatpush2.msra.mxu0 0.0
    %124 = vmatprep.subr.mxu0 0.0
    %125 = vmatpush2.msra.mxu0 0.0
    %126 = vmatprep.subr.mxu0 0.0
    %127 = vmatpush2.msra.mxu0 0.0
    %128 = vmatprep.subr.mxu0 0.0
    %129 = vmatpush2.msra.mxu0 0.0
    %130 = vmatprep.subr.mxu0 0.0
    %131 = vmatpush2.msra.mxu0 0.0
    %132 = vmatprep.subr.mxu0 0.0
    %133 = vmatpush2.msra.mxu0 0.0
    %134 = vmatprep.subr.mxu0 0.0
    %135 = vmatpush2.msra.mxu0 0.0
    %136 = vmatprep.subr.mxu0 0.0
    %137 = vmatpush2.msra.mxu0 0.0
    %138 = vmatprep.subr.mxu0 0.0
    %139 = vmatpush2.msra.mxu0 0.0
    %140 = vmatprep.mubr.f32.mxu0 0.0
    %141 = vmatmul.mubr.f32.gmra.mxu0 %v61
    %v142 = vpop.f32.mrf.mxu0
    %v143 = vadd.f32 %v42, %v142
    %v144 = vpop.f32.mrf.mxu0
    %145 = vmatprep.mubr.f32.mxu0 0.0
    %146 = vmatmul.mubr.f32.gmra.mxu0 %v64
    %v147 = vpop.f32.mrf.mxu0
    %v148 = vadd.f32 %v47, %v147
    %v149 = vpop.f32.mrf.mxu0
    %150 = vmatprep.mubr.f32.mxu0 0.0
    %151 = vmatmul.mubr.f32.gmra.mxu0 %v67
    %v152 = vpop.f32.mrf.mxu0
    %v153 = vadd.f32 %v52, %v152
    %v154 = vpop.f32.mrf.mxu0
    %155 = vmatprep.mubr.f32.mxu0 0.0
    %156 = vmatmul.mubr.f32.gmra.mxu0 %v70
    %v157 = vpop.f32.mrf.mxu0
    %v158 = vadd.f32 %v57, %v157
    %v159 = vpop.f32.mrf.mxu0
    %160 = vdwg.mxu0
    %v161 = vmax.f32 %v143, 0.0
    %v162 = vmax.f32 %v148, 0.0
    %v163 = vmax.f32 %v153, 0.0
    %v164 = vmax.f32 %v158, 0.0
    %v165 = vld [vmem:[%s3] sm:$0xff]
    %v166 = vld [vmem:[%s3 + $0x8] sm:$0xff]
    %v167 = vld [vmem:[%s3 + $0x10] sm:$0xff]
    %v168 = vld [vmem:[%s3 + $0x18] sm:$0xff]
    %v169 = vld [vmem:[%s4] sm:$0xff]
    %v170 = vld [vmem:[%s4 + $0x8] sm:$0xff]
    %v171 = vld [vmem:[%s4 + $0x10] sm:$0xff]
    %v172 = vld [vmem:[%s4 + $0x18] sm:$0xff]
    %174 = vset.pattern.permute.xlu0 0
    %175 = vperm.xlu0 %174, %v169
    %v176 = vpop.permute.xlu0 %175
    %179 = vset.pattern.permute.xlu0 0
    %180 = vperm.xlu0 %179, %v170
    %v181 = vpop.permute.xlu0 %180
    %184 = vset.pattern.permute.xlu0 0
    %185 = vperm.xlu0 %184, %v171
    %v186 = vpop.permute.xlu0 %185
    %189 = vset.pattern.permute.xlu0 0
    %190 = vperm.xlu0 %189, %v172
    %v191 = vpop.permute.xlu0 %190
    %vm193 = vcmask 261120
    %v195 = vsel %vm193, %v165, 0
    %v198 = vsel %vm193, %v166, 0
    %v201 = vsel %vm193, %v167, 0
    %v204 = vsel %vm193, %v168, 0
    %206 = vmatprep.subr.mxu0 0.0
    %207 = vmatpush1.msra.mxu0 0.0
    %208 = vmatprep.subr.mxu0 0.0
    %209 = vmatpush1.msra.mxu0 0.0
    %210 = vmatprep.subr.mxu0 0.0
    %211 = vmatpush1.msra.mxu0 0.0
    %212 = vmatprep.subr.mxu0 0.0
    %213 = vmatpush1.msra.mxu0 0.0
    %214 = vmatprep.subr.mxu0 0.0
    %215 = vmatpush1.msra.mxu0 0.0
    %216 = vmatprep.subr.mxu0 0.0
    %217 = vmatpush1.msra.mxu0 0.0
    %218 = vmatprep.subr.mxu0 0.0
    %219 = vmatpush1.msra.mxu0 0.0
    %220 = vmatprep.subr.mxu0 0.0
    %221 = vmatpush1.msra.mxu0 0.0
    %222 = vmatprep.subr.mxu0 0.0
    %223 = vmatpush1.msra.mxu0 0.0
    %224 = vmatprep.subr.mxu0 0.0
    %225 = vmatpush1.msra.mxu0 0.0
    %226 = vmatprep.subr.mxu0 0.0
    %227 = vmatpush1.msra.mxu0 0.0
    %228 = vmatprep.subr.mxu0 0.0
    %229 = vmatpush1.msra.mxu0 0.0
    %230 = vmatprep.subr.mxu0 0.0
    %231 = vmatpush1.msra.mxu0 %v164
    %232 = vmatprep.subr.mxu0 0.0
    %233 = vmatpush1.msra.mxu0 %v163
    %234 = vmatprep.subr.mxu0 0.0
    %235 = vmatpush1.msra.mxu0 %v162
    %236 = vmatprep.subr.mxu0 0.0
    %237 = vmatpush1.msra.mxu0 %v161
    %238 = vmatprep.subr.mxu0 0.0
    %239 = vmatpush2.msra.mxu0 0.0
    %240 = vmatprep.subr.mxu0 0.0
    %241 = vmatpush2.msra.mxu0 0.0
    %242 = vmatprep.subr.mxu0 0.0
    %243 = vmatpush2.msra.mxu0 0.0
    %244 = vmatprep.subr.mxu0 0.0
    %245 = vmatpush2.msra.mxu0 0.0
    %246 = vmatprep.subr.mxu0 0.0
    %247 = vmatpush2.msra.mxu0 0.0
    %248 = vmatprep.subr.mxu0 0.0
    %249 = vmatpush2.msra.mxu0 0.0
    %250 = vmatprep.subr.mxu0 0.0
    %251 = vmatpush2.msra.mxu0 0.0
    %252 = vmatprep.subr.mxu0 0.0
    %253 = vmatpush2.msra.mxu0 0.0
    %254 = vmatprep.subr.mxu0 0.0
    %255 = vmatpush2.msra.mxu0 0.0
    %256 = vmatprep.subr.mxu0 0.0
    %257 = vmatpush2.msra.mxu0 0.0
    %258 = vmatprep.subr.mxu0 0.0
    %259 = vmatpush2.msra.mxu0 0.0
    %260 = vmatprep.subr.mxu0 0.0
    %261 = vmatpush2.msra.mxu0 0.0
    %262 = vmatprep.subr.mxu0 0.0
    %263 = vmatpush2.msra.mxu0 0.0
    %264 = vmatprep.subr.mxu0 0.0
    %265 = vmatpush2.msra.mxu0 0.0
    %266 = vmatprep.subr.mxu0 0.0
    %267 = vmatpush2.msra.mxu0 0.0
    %268 = vmatprep.subr.mxu0 0.0
    %269 = vmatpush2.msra.mxu0 0.0
    %270 = vmatprep.mubr.f32.mxu0 0.0
    %271 = vmatmul.mubr.f32.gmra.mxu0 %v195
    %v272 = vpop.f32.mrf.mxu0
    %v273 = vadd.f32 %v176, %v272
    %v274 = vpop.f32.mrf.mxu0
    %275 = vmatprep.mubr.f32.mxu0 0.0
    %276 = vmatmul.mubr.f32.gmra.mxu0 %v198
    %v277 = vpop.f32.mrf.mxu0
    %v278 = vadd.f32 %v181, %v277
    %v279 = vpop.f32.mrf.mxu0
    %280 = vmatprep.mubr.f32.mxu0 0.0
    %281 = vmatmul.mubr.f32.gmra.mxu0 %v201
    %v282 = vpop.f32.mrf.mxu0
    %v283 = vadd.f32 %v186, %v282
    %v284 = vpop.f32.mrf.mxu0
    %285 = vmatprep.mubr.f32.mxu0 0.0
    %286 = vmatmul.mubr.f32.gmra.mxu0 %v204
    %v287 = vpop.f32.mrf.mxu0
    %v288 = vadd.f32 %v191, %v287
    %v289 = vpop.f32.mrf.mxu0
    %290 = vdwg.mxu0
    %v291 = vmax.f32 %v273, 0.0
    %v292 = vmax.f32 %v278, 0.0
    %v293 = vmax.f32 %v283, 0.0
    %v294 = vmax.f32 %v288, 0.0
    %v295 = vld [vmem:[%s5] sm:$0x1]
    %v296 = vld [vmem:[#allocation2] sm:$0x1]
    %298 = vset.pattern.permute.xlu0 0
    %299 = vperm.xlu0 %298, %v296
    %v300 = vpop.permute.xlu0 %299
    %v302 = vlaneseq
    %v303 = vshrl.u32 %v302, 7
    %v304 = vsub.s32 0, %v303
    %v305 = vrot.slane %v300, %v304
    %v307 = vsel %vm193, %v295, 0
    %309 = vmatprep.subr.mxu0 0.0
    %310 = vmatpush1.msra.mxu0 0.0
    %311 = vmatprep.subr.mxu0 0.0
    %312 = vmatpush1.msra.mxu0 0.0
    %313 = vmatprep.subr.mxu0 0.0
    %314 = vmatpush1.msra.mxu0 0.0
    %315 = vmatprep.subr.mxu0 0.0
    %316 = vmatpush1.msra.mxu0 0.0
    %317 = vmatprep.subr.mxu0 0.0
    %318 = vmatpush1.msra.mxu0 0.0
    %319 = vmatprep.subr.mxu0 0.0
    %320 = vmatpush1.msra.mxu0 0.0
    %321 = vmatprep.subr.mxu0 0.0
    %322 = vmatpush1.msra.mxu0 0.0
    %323 = vmatprep.subr.mxu0 0.0
    %324 = vmatpush1.msra.mxu0 0.0
    %325 = vmatprep.subr.mxu0 0.0
    %326 = vmatpush1.msra.mxu0 0.0
    %327 = vmatprep.subr.mxu0 0.0
    %328 = vmatpush1.msra.mxu0 0.0
    %329 = vmatprep.subr.mxu0 0.0
    %330 = vmatpush1.msra.mxu0 0.0
    %331 = vmatprep.subr.mxu0 0.0
    %332 = vmatpush1.msra.mxu0 0.0
    %333 = vmatprep.subr.mxu0 0.0
    %334 = vmatpush1.msra.mxu0 %v294
    %335 = vmatprep.subr.mxu0 0.0
    %336 = vmatpush1.msra.mxu0 %v293
    %337 = vmatprep.subr.mxu0 0.0
    %338 = vmatpush1.msra.mxu0 %v292
    %339 = vmatprep.subr.mxu0 0.0
    %340 = vmatpush1.msra.mxu0 %v291
    %341 = vmatprep.subr.mxu0 0.0
    %342 = vmatpush2.msra.mxu0 0.0
    %343 = vmatprep.subr.mxu0 0.0
    %344 = vmatpush2.msra.mxu0 0.0
    %345 = vmatprep.subr.mxu0 0.0
    %346 = vmatpush2.msra.mxu0 0.0
    %347 = vmatprep.subr.mxu0 0.0
    %348 = vmatpush2.msra.mxu0 0.0
    %349 = vmatprep.subr.mxu0 0.0
    %350 = vmatpush2.msra.mxu0 0.0
    %351 = vmatprep.subr.mxu0 0.0
    %352 = vmatpush2.msra.mxu0 0.0
    %353 = vmatprep.subr.mxu0 0.0
    %354 = vmatpush2.msra.mxu0 0.0
    %355 = vmatprep.subr.mxu0 0.0
    %356 = vmatpush2.msra.mxu0 0.0
    %357 = vmatprep.subr.mxu0 0.0
    %358 = vmatpush2.msra.mxu0 0.0
    %359 = vmatprep.subr.mxu0 0.0
    %360 = vmatpush2.msra.mxu0 0.0
    %361 = vmatprep.subr.mxu0 0.0
    %362 = vmatpush2.msra.mxu0 0.0
    %363 = vmatprep.subr.mxu0 0.0
    %364 = vmatpush2.msra.mxu0 0.0
    %365 = vmatprep.subr.mxu0 0.0
    %366 = vmatpush2.msra.mxu0 0.0
    %367 = vmatprep.subr.mxu0 0.0
    %368 = vmatpush2.msra.mxu0 0.0
    %369 = vmatprep.subr.mxu0 0.0
    %370 = vmatpush2.msra.mxu0 0.0
    %371 = vmatprep.subr.mxu0 0.0
    %372 = vmatpush2.msra.mxu0 0.0
    %373 = vmatprep.mubr.f32.mxu0 0.0
    %374 = vmatmul.mubr.f32.gmra.mxu0 %v307
    %v375 = vpop.f32.mrf.mxu0
    %v376 = vadd.f32 %v305, %v375
    %v377 = vpop.f32.mrf.mxu0
    %378 = vdwg.mxu0
    %vm379 = vcmask 40960
    %380 = vst.msk [vmem:[#allocation3] sm:$0x1] %vm379, %v376
    // Predicated region
    $region30: #{binary_classifier_forward.1} parent=1 // pred_check
      _
    $region31: #{binary_classifier_forward.1} parent=1 // pred_check_branch
      %382 = sbr.rel (0) target = $region33
    $region32: #{binary_classifier_forward.1} parent=1 // pred_region
      %s384 = ssub.s32 16, 16
      %385 = vsyncadd [#allocation4], %s384
      %s387 = sshll.u32 [#allocation3], 4
      %s388 = int_to_ptr.vmem [resolvable:$true] %s387
      %390 = dma.vmem_to_hbm [thread:$0]  %s388, 16, %s7, [#allocation4]
    $region33: #{binary_classifier_forward.1} parent=1 // pred_fallthru
      _
    // Predicated region
    $region34: #{binary_classifier_forward.1} parent=1 // pred_check
      _
    $region35: #{binary_classifier_forward.1} parent=1 // pred_check_branch
      %392 = sbr.rel (0) target = $region37
    $region36: #{binary_classifier_forward.1} parent=1 // pred_region
      %393 = dma.done [#allocation4], 16
    $region37: #{binary_classifier_forward.1} parent=1 // pred_fallthru
      _
    %394 = vsyncpa [#allocation4], 1

</llo_original>
